<compile_context>
chip_gen: v5e
topology: v5e:2x2
jax: 0.10.0
libtpu: 0.0.40
codegen_flags: <defaults>
</compile_context>

<pallas_src>
import jax
import jax.numpy as jnp
from jax.experimental import pallas as pl
from jax.experimental.pallas import tpu as pltpu


_EPS = 1e-12
_LANE = 128
_SUBLANE_BYTES = 32          # sublane granule: 8 elems f32, 16 bf16, 32 int8
_HW_TILE_TARGET = 16384      # lanes per grid step (big tiles reach ~86% of HBM roofline)
_MAX_B_TILE = 8              # bound the per-step batch block


def _normalize_kernel(x_ref, o_ref):
    # x_ref / o_ref: (B_TILE, C, T_HW).  Reduction over C (sublanes) is strictly
    # per-lane, so garbage lanes in boundary blocks stay in their own columns
    # and are dropped by the masked output write.
    x = x_ref[...].astype(jnp.float32)                               # (B, C, T)
    qn = jnp.sqrt(jnp.sum(x * x, axis=1, keepdims=True)) + _EPS      # (B, 1, T)
    # Re-read from VMEM (vld slots have huge slack in a memory-bound kernel) so
    # the f32 slab need not stay live across the reduction for large C.  Exact
    # division matches torch bit-for-bit in spirit and costs no wall-clock here.
    o_ref[...] = (x_ref[...].astype(jnp.float32) / qn).astype(o_ref.dtype)


def _round_up(a: int, b: int) -> int:
    return (a + b - 1) // b * b


def _machine_params():
    """(working-set budget for 4 double-buffered tiles, vmem_limit_bytes, min step bytes)."""
    try:
        kind = jax.devices()[0].device_kind.lower()
    except Exception:
        kind = ""
    if "v7" in kind:
        # 64 MiB physical VMEM per TensorCore, ~3.2 TB/s HBM.
        return 32 << 20, 48 << 20, 3 << 20
    if "v5" in kind:
        # 128 MiB physical VMEM, ~0.82 TB/s HBM: smaller steps already amortize.
        return 48 << 20, 64 << 20, 1 << 20
    # v6e (and default): 128 MiB physical VMEM, ~1.4 TB/s HBM.
    return 48 << 20, 64 << 20, 2 << 20


def normalize(x: jax.Array) -> jax.Array:
    """L2-normalize x (N, C, H, W) over the channel axis, like the torch module."""
    N, C, H, W = x.shape
    HW = H * W
    itemsize = jnp.dtype(x.dtype).itemsize
    sub = max(1, _SUBLANE_BYTES // itemsize)        # sublane granule in elements
    c_pad = _round_up(C, sub)                       # physical (padded) channel rows

    vmem_budget, vmem_limit, min_step = _machine_params()

    # ---- spatial (lane) tile: multiple of 128, bounded by the VMEM budget ----
    # 4 live tiles per step: input + output, each double-buffered.
    max_t_hw = max(_LANE, (vmem_budget // (4 * c_pad * itemsize)) // _LANE * _LANE)
    if HW <= min(_HW_TILE_TARGET, max_t_hw):
        t_hw = HW           # full extent: no 128-multiple requirement
        # TODO(synk): for HW < 128 a lane-dense repack (folding images into the
        # lane axis) would avoid masked vst.msk stores; skipped as typical
        # feature maps are >= 128 spatial positions.
    else:
        t_hw = min(_HW_TILE_TARGET, max_t_hw)       # multiple of 128; ragged tail is masked
    t_lanes = _round_up(t_hw, _LANE)                # lane-padded physical width

    # ---- batch tile: amortize the ~0.35 us per-grid-step overhead ----
    tile_bytes = c_pad * t_lanes * itemsize         # one buffered tile, one image
    b_tile = 1
    for d in range(1, min(N, _MAX_B_TILE) + 1):
        if 4 * d * tile_bytes > vmem_budget:
            break
        b_tile = d
        if 2 * d * tile_bytes >= min_step:          # bytes moved per step (in + out)
            break

    x2 = x.reshape(N, C, HW)
    grid = (pl.cdiv(N, b_tile), pl.cdiv(HW, t_hw))  # no host-side pad; Pallas masks tails

    out = pl.pallas_call(
        _normalize_kernel,
        out_shape=jax.ShapeDtypeStruct((N, C, HW), x.dtype),
        grid_spec=pltpu.PrefetchScalarGridSpec(
            num_scalar_prefetch=0,
            grid=grid,
            in_specs=[pl.BlockSpec((b_tile, C, t_hw), lambda n, h: (n, 0, h))],
            out_specs=pl.BlockSpec((b_tile, C, t_hw), lambda n, h: (n, 0, h)),
        ),
        compiler_params=pltpu.CompilerParams(
            # Reduction is over C only -> both grid axes independent; lets the
            # runtime shard grid steps across both TensorCores on v7x.
            dimension_semantics=("parallel", "parallel"),
            vmem_limit_bytes=vmem_limit,
        ),
    )(x2)

    return out.reshape(N, C, H, W)


def _reference(x: jax.Array) -> jax.Array:
    xf = x.astype(jnp.float32)
    qn = jnp.sqrt(jnp.sum(xf * xf, axis=1, keepdims=True)) + _EPS
    return (xf / qn).astype(x.dtype)


if __name__ == "__main__":
    key = jax.random.PRNGKey(0)
    # Small NCHW input consistent with the module's forward (conv-style tensor).
    x = jax.random.normal(key, (2, 4, 16, 16), dtype=jnp.float32)

    y = jax.block_until_ready(normalize(x))
    y_ref = _reference(x)

    assert y.shape == x.shape and y.dtype == x.dtype
    assert jnp.allclose(y, y_ref, atol=1e-5, rtol=1e-5)

    print("KERNEL_OK")
</pallas_src>

<mosaic_0001>
module attributes {stable_mosaic.version = 11 : i64} {
  func.func @_normalize_kernel(%arg0: i32, %arg1: i32, %arg2: memref<2x4x256xf32, #tpu.memory_space<vmem>>, %arg3: memref<2x4x256xf32, #tpu.memory_space<vmem>>) attributes {dimension_semantics = [#tpu.dimension_semantics<parallel>, #tpu.dimension_semantics<parallel>], iteration_bounds = array<i64: 1, 1>, scalar_prefetch = 0 : i64, scratch_operands = 0 : i64, tpu.core_type = #tpu.core_type<tc>, window_params = [{transform_indices = @transform_0, window_bounds = array<i64: 2, 4, 256>}, {transform_indices = @transform_1, window_bounds = array<i64: 2, 4, 256>}]} {
    %c0 = arith.constant 0 : index
    %c0_0 = arith.constant 0 : index
    %c0_1 = arith.constant 0 : index
    %0 = vector.load %arg2[%c0, %c0_0, %c0_1] : memref<2x4x256xf32, #tpu.memory_space<vmem>>, vector<2x4x256xf32>
    %1 = arith.mulf %0, %0 : vector<2x4x256xf32>
    %cst = arith.constant dense<0.000000e+00> : vector<2x256xf32>
    %2 = vector.multi_reduction <add>, %1, %cst [1] : vector<2x4x256xf32> to vector<2x256xf32>
    %3 = vector.shape_cast %2 : vector<2x256xf32> to vector<2x1x256xf32>
    %4 = math.sqrt %3 : vector<2x1x256xf32>
    %cst_2 = arith.constant 9.99999996E-13 : f32
    %5 = vector.broadcast %cst_2 : f32 to vector<2x1x256xf32>
    %6 = arith.addf %4, %5 : vector<2x1x256xf32>
    %c0_3 = arith.constant 0 : index
    %c0_4 = arith.constant 0 : index
    %c0_5 = arith.constant 0 : index
    %7 = vector.load %arg2[%c0_3, %c0_4, %c0_5] : memref<2x4x256xf32, #tpu.memory_space<vmem>>, vector<2x4x256xf32>
    %8 = vector.broadcast %6 : vector<2x1x256xf32> to vector<2x4x256xf32>
    %9 = arith.divf %7, %8 : vector<2x4x256xf32>
    %c0_6 = arith.constant 0 : index
    %c0_7 = arith.constant 0 : index
    %c0_8 = arith.constant 0 : index
    %10 = vector.load %arg3[%c0_6, %c0_7, %c0_8] : memref<2x4x256xf32, #tpu.memory_space<vmem>>, vector<2x4x256xf32>
    tpu.vector_store %arg3[%c0_6, %c0_7, %c0_8], %9 {strides = array<i32>} : memref<2x4x256xf32, #tpu.memory_space<vmem>>, vector<2x4x256xf32>,
    return
  }
  func.func @transform_0(%arg0: i32, %arg1: i32) -> (i32, i32, i32) {
    %c0_i32 = arith.constant 0 : i32
    %c0_i32_0 = arith.constant 0 : i32
    return %arg0, %c0_i32, %arg1 : i32, i32, i32
  }
  func.func @transform_1(%arg0: i32, %arg1: i32) -> (i32, i32, i32) {
    %c0_i32 = arith.constant 0 : i32
    %c0_i32_0 = arith.constant 0 : i32
    return %arg0, %c0_i32, %arg1 : i32, i32, i32
  }
}

</mosaic_0001>

<llo_original>
// kernel: tpu_custom_call.1
$region0: #{tpu_custom_call.1}
  #allocation0 [shape = 'u32[]', space=smem, size = 0x4, offset = 0x4, fixed_abs, tag = 'smem constant byte address 0x4 - core index']
  #allocation1 [shape = 'u32[72,128]{1,0:T(1,128)}', space=vmem, size = 0x9000, scoped, tag = 'internal scratch']
  %s0 = inlined_call_operand.hbm [shape: f32[2,4,256], index: 0, kind: input, shape index: {}]
  %s1 = inlined_call_operand.hbm [shape: f32[2,4,256], index: 1, kind: output, shape index: {}]
  %s2 = sld [smem:[#allocation0]]
  $region18: #{tpu_custom_call.1} parent=0
    _
  %s4 = ssub.s32 1, %s2
  %s5 = scalar_select 0, %s4, %s2
  $region1: #{tpu_custom_call.1} parent=0
    #allocation2 [shape = 'u8[8192]{0}', space=vmem, size = 0x2000, scoped, tag = 'input window, operand 0, single buffered']
    #allocation3 [shape = 's32[1]{0}', space=sflag, size = 0x4, scoped, tag = 'scoped memory for tpu_custom_call.1']
    #allocation4 [shape = 's32[1]{0}', space=sflag, size = 0x4, scoped, tag = 'scoped memory for tpu_custom_call.1']
    #allocation5 [shape = 'u8[8192]{0}', space=vmem, size = 0x2000, scoped, tag = 'output window, operand 0, single buffered']
    %6 = vsyncpa [#allocation3], 0
    %7 = vsyncpa [#allocation4], 0
    // Predicated region
    $region2: #{tpu_custom_call.1} parent=1 // pred_check
      _
    $region3: #{tpu_custom_call.1} parent=1 // pred_check_branch
      %9 = sbr.rel (0) target = $region5
    $region4: #{tpu_custom_call.1} parent=1 // pred_region
      %11 = vsyncadd [#allocation3], 0
      %s12 = sshll.u32 %s0, 4
      %s13 = int_to_ptr.hbm [resolvable:$true] %s12
      %s14 = sshll.u32 [#allocation2], 4
      %s15 = int_to_ptr.vmem [resolvable:$true] %s14
      %20 = dma.hbm_to_vmem [thread:$0]  %s13, 256, %s15, [#allocation3], 128, 128, 8
    $region5: #{tpu_custom_call.1} parent=1 // pred_fallthru
      _
    // Predicated region
    $region6: #{tpu_custom_call.1} parent=1 // pred_check
      _
    $region7: #{tpu_custom_call.1} parent=1 // pred_check_branch
      %22 = sbr.rel (0) target = $region9
    $region8: #{tpu_custom_call.1} parent=1 // pred_region
      %24 = dma.done [#allocation3], 256
    $region9: #{tpu_custom_call.1} parent=1 // pred_fallthru
      _
    %v25 = vld [vmem:[#allocation2] sm:$0xff]
    %v26 = vld [vmem:[#allocation2 + $0x8] sm:$0xff]
    %v27 = vmul.f32 %v25, %v25
    %v28 = vmul.f32 %v26, %v26
    %31 = vst [vmem:[#allocation1] ss:$2 sm:$0xff] %v27
    %v32 = vld.sshfl [vmem:[#allocation1] sm:$0xff pattern:$0x75316420]
    %v33 = vld.sshfl [vmem:[#allocation1 + $0x8] sm:$0xff pattern:$0x75316420]
    %s34 = scalar_lea.vmem [#allocation1], 16
    %35 = vst [vmem:[%s34] ss:$2 sm:$0xff] %v28
    %v36 = vld.sshfl [vmem:[#allocation1 + $0x10] sm:$0xff pattern:$0x75316420]
    %v37 = vld.sshfl [vmem:[#allocation1 + $0x18] sm:$0xff pattern:$0x75316420]
    %vm42 = vcmask 1043456
    %v43 = vsel %vm42, %v32, 0.0
    %v44 = vrot.slane %v43, 4
    %v45 = vadd.f32 %v43, %v44
    %v46 = vrot.slane %v45, 2
    %v47 = vadd.f32 %v45, %v46
    %v48 = vrot.slane %v47, 1
    %v49 = vadd.f32 %v47, %v48
    %v50 = vsel %vm42, %v33, 0.0
    %v51 = vrot.slane %v50, 4
    %v52 = vadd.f32 %v50, %v51
    %v53 = vrot.slane %v52, 2
    %v54 = vadd.f32 %v52, %v53
    %v55 = vrot.slane %v54, 1
    %v56 = vadd.f32 %v54, %v55
    %v57 = vsel %vm42, %v36, 0.0
    %v58 = vrot.slane %v57, 4
    %v59 = vadd.f32 %v57, %v58
    %v60 = vrot.slane %v59, 2
    %v61 = vadd.f32 %v59, %v60
    %v62 = vrot.slane %v61, 1
    %v63 = vadd.f32 %v61, %v62
    %v64 = vsel %vm42, %v37, 0.0
    %v65 = vrot.slane %v64, 4
    %v66 = vadd.f32 %v64, %v65
    %v67 = vrot.slane %v66, 2
    %v68 = vadd.f32 %v66, %v67
    %v69 = vrot.slane %v68, 1
    %v70 = vadd.f32 %v68, %v69
    %v71 = vrsqrt.pop %v49
    %v72 = vmul.f32 %v71, %v49
    %v73 = vmul.f32 %v72, %v71
    %v74 = vmul.f32 0.5, %v73
    %v75 = vsub.f32 1.5, %v74
    %v76 = vmul.f32 %v71, %v75
    %v77 = vmul.f32 %v49, %v76
    %vm78 = vcmp.eq.f32.partialorder %v49, inf
    %v79 = vsel %vm78, %v49, %v77
    %vm80 = vcmp.eq.f32.partialorder %v49, 0.0
    %v81 = vand.u32 %v49, 2147483648
    %v82 = vsel %vm80, %v81, %v79
    %v83 = vrsqrt.pop %v56
    %v84 = vmul.f32 %v83, %v56
    %v85 = vmul.f32 %v84, %v83
    %v86 = vmul.f32 0.5, %v85
    %v87 = vsub.f32 1.5, %v86
    %v88 = vmul.f32 %v83, %v87
    %v89 = vmul.f32 %v56, %v88
    %vm90 = vcmp.eq.f32.partialorder %v56, inf
    %v91 = vsel %vm90, %v56, %v89
    %vm92 = vcmp.eq.f32.partialorder %v56, 0.0
    %v93 = vand.u32 %v56, 2147483648
    %v94 = vsel %vm92, %v93, %v91
    %v95 = vrsqrt.pop %v63
    %v96 = vmul.f32 %v95, %v63
    %v97 = vmul.f32 %v96, %v95
    %v98 = vmul.f32 0.5, %v97
    %v99 = vsub.f32 1.5, %v98
    %v100 = vmul.f32 %v95, %v99
    %v101 = vmul.f32 %v63, %v100
    %vm102 = vcmp.eq.f32.partialorder %v63, inf
    %v103 = vsel %vm102, %v63, %v101
    %vm104 = vcmp.eq.f32.partialorder %v63, 0.0
    %v105 = vand.u32 %v63, 2147483648
    %v106 = vsel %vm104, %v105, %v103
    %v107 = vrsqrt.pop %v70
    %v108 = vmul.f32 %v107, %v70
    %v109 = vmul.f32 %v108, %v107
    %v110 = vmul.f32 0.5, %v109
    %v111 = vsub.f32 1.5, %v110
    %v112 = vmul.f32 %v107, %v111
    %v113 = vmul.f32 %v70, %v112
    %vm114 = vcmp.eq.f32.partialorder %v70, inf
    %v115 = vsel %vm114, %v70, %v113
    %vm116 = vcmp.eq.f32.partialorder %v70, 0.0
    %v117 = vand.u32 %v70, 2147483648
    %v118 = vsel %vm116, %v117, %v115
    %v119 = vadd.f32 %v82, 1e-12
    %v120 = vadd.f32 %v94, 1e-12
    %v121 = vadd.f32 %v106, 1e-12
    %v122 = vadd.f32 %v118, 1e-12
    %v127 = vrot.slane %v120, 4
    %v128 = vrot.slane %v122, 4
    %v129 = vsel %vm42, %v119, %v127
    %v130 = vsel %vm42, %v121, %v128
    %v133 = vrcp.pop %v129
    %v134 = vmul.f32 %v129, %v133
    %v135 = vsub.f32 1.0, %v134
    %v136 = vmul.f32 %v133, %v135
    %v137 = vadd.f32 %v133, %v136
    %vm138 = vweird.f32 %v129
    %vm139 = vweird.f32 %v133
    %vm140 = vmor %vm138, %vm139
    %v141 = vsel %vm140, %v133, %v137
    %v142 = vand.u32 2147483647, %v129
    %vm143 = vcmp.eq.f32.partialorder %v142, 8.507059e+37
    %v144 = vand.u32 %v129, 2147483648
    %v145 = vor.u32 1.1754944e-38, %v144
    %v146 = vsel %vm143, %v145, %v141
    %v147 = vmul.f32 %v25, %v146
    %v148 = vrcp.pop %v130
    %v149 = vmul.f32 %v130, %v148
    %v150 = vsub.f32 1.0, %v149
    %v151 = vmul.f32 %v148, %v150
    %v152 = vadd.f32 %v148, %v151
    %vm153 = vweird.f32 %v130
    %vm154 = vweird.f32 %v148
    %vm155 = vmor %vm153, %vm154
    %v156 = vsel %vm155, %v148, %v152
    %v157 = vand.u32 2147483647, %v130
    %vm158 = vcmp.eq.f32.partialorder %v157, 8.507059e+37
    %v159 = vand.u32 %v130, 2147483648
    %v160 = vor.u32 1.1754944e-38, %v159
    %v161 = vsel %vm158, %v160, %v156
    %v162 = vmul.f32 %v26, %v161
    %163 = vst [vmem:[#allocation5] sm:$0xff] %v147
    %164 = vst [vmem:[#allocation5 + $0x8] sm:$0xff] %v162
    // Predicated region
    $region10: #{tpu_custom_call.1} parent=1 // pred_check
      _
    $region11: #{tpu_custom_call.1} parent=1 // pred_check_branch
      %166 = sbr.rel (0) target = $region13
    $region12: #{tpu_custom_call.1} parent=1 // pred_region
      %168 = vsyncadd [#allocation4], 0
      %s169 = sshll.u32 [#allocation5], 4
      %s170 = int_to_ptr.vmem [resolvable:$true] %s169
      %s171 = sshll.u32 %s1, 4
      %s172 = int_to_ptr.hbm [resolvable:$true] %s171
      %177 = dma.vmem_to_hbm [thread:$0]  %s170, 256, %s172, [#allocation4], 128, 128, 8
    $region13: #{tpu_custom_call.1} parent=1 // pred_fallthru
      _
    // Predicated region
    $region14: #{tpu_custom_call.1} parent=1 // pred_check
      _
    $region15: #{tpu_custom_call.1} parent=1 // pred_check_branch
      %179 = sbr.rel (0) target = $region17
    $region16: #{tpu_custom_call.1} parent=1 // pred_region
      %181 = dma.done [#allocation4], 256
    $region17: #{tpu_custom_call.1} parent=1 // pred_fallthru
      _
    %182 = vsyncpa [#allocation3], 1
    %183 = vsyncpa [#allocation4], 1

</llo_original>
